<compile_context>
chip_gen: v5e
topology: v5e:2x2
jax: 0.10.0
libtpu: 0.0.40
codegen_flags: <defaults>
</compile_context>

<pallas_src>
import functools

import jax
import jax.numpy as jnp
from jax.experimental import pallas as pl
from jax.experimental.pallas import tpu as pltpu

LANE = 128
_VMEM_LIMIT = 32 * 1024 * 1024  # safe on v5e/v6e (128 MiB) and v7x (64 MiB)
A_SCALE = 127.0                 # int8 quantization scale for A_hat entries in [0, 1]


def _round_up(x, m):
    return ((x + m - 1) // m) * m


def _pad2(x, rows, cols):
    r, c = x.shape
    return jnp.pad(x, ((0, rows - r), (0, cols - c)))


# ----------------------------- kernels ---------------------------------------


def lin1_kernel(x_ref, w_ref, b_ref, o_ref):
    """h1 = x @ W1 + b1 over a row tile (used only when f_in > padded hidden)."""
    h = jnp.dot(x_ref[...], w_ref[...], preferred_element_type=jnp.float32) + b_ref[...]
    o_ref[...] = h.astype(o_ref.dtype)


def prop1_fused_kernel(bid_ref, cnt_ref, a_ref, x_ref, w1_ref, b1_ref, w2_ref, b2_ref,
                       o_ref, acc_ref, *, inv_scale):
    """z = relu(A_hat @ (x @ W1 + b1)) @ W2 + b2, lin1 folded into the k-loop.

    A_hat is int8; zero blocks are skipped via the scalar-prefetch schedule."""
    i = pl.program_id(0)
    k = pl.program_id(1)

    @pl.when(k == 0)
    def _():
        acc_ref[...] = jnp.zeros_like(acc_ref)

    @pl.when(k < cnt_ref[i])
    def _():
        # h1 tile computed on the fly (bf16 MXU operands, f32 accumulation).
        h1 = jnp.dot(x_ref[...], w1_ref[...],
                     preferred_element_type=jnp.float32) + b1_ref[...]
        a = a_ref[...].astype(jnp.bfloat16)  # int8 -> bf16; 1/127 applied in epilogue
        acc_ref[...] += jnp.dot(a, h1.astype(jnp.bfloat16),
                                preferred_element_type=jnp.float32)

    @pl.when(k == pl.num_programs(1) - 1)
    def _():
        h = jnp.maximum(acc_ref[...] * inv_scale, 0.0)  # dequant + relu
        # F.dropout(x, training=False) is identity in eval mode.
        z = jnp.dot(h.astype(w2_ref.dtype), w2_ref[...],
                    preferred_element_type=jnp.float32) + b2_ref[...]
        o_ref[...] = z.astype(o_ref.dtype)


def prop1_lin2_kernel(bid_ref, cnt_ref, a_ref, h_ref, w2_ref, b2_ref, o_ref, acc_ref,
                      *, inv_scale):
    """z = relu(A_hat @ h1) @ W2 + b2 with precomputed h1 (wide-feature path)."""
    i = pl.program_id(0)
    k = pl.program_id(1)

    @pl.when(k == 0)
    def _():
        acc_ref[...] = jnp.zeros_like(acc_ref)

    @pl.when(k < cnt_ref[i])
    def _():
        a = a_ref[...].astype(jnp.bfloat16)
        acc_ref[...] += jnp.dot(a, h_ref[...], preferred_element_type=jnp.float32)

    @pl.when(k == pl.num_programs(1) - 1)
    def _():
        h = jnp.maximum(acc_ref[...] * inv_scale, 0.0)
        z = jnp.dot(h.astype(w2_ref.dtype), w2_ref[...],
                    preferred_element_type=jnp.float32) + b2_ref[...]
        o_ref[...] = z.astype(o_ref.dtype)


def prop2_logsoftmax_kernel(bid_ref, cnt_ref, a_ref, z_ref, o_ref,
                            *, num_classes, inv_scale):
    """out = log_softmax(A_hat @ z, axis=1).

    Accumulates directly into the (resident) f32 output block; the class-dim
    lane padding is masked out of the softmax."""
    i = pl.program_id(0)
    k = pl.program_id(1)

    @pl.when(k == 0)
    def _():
        o_ref[...] = jnp.zeros_like(o_ref)

    @pl.when(k < cnt_ref[i])
    def _():
        a = a_ref[...].astype(jnp.bfloat16)
        o_ref[...] += jnp.dot(a, z_ref[...], preferred_element_type=jnp.float32)

    @pl.when(k == pl.num_programs(1) - 1)
    def _():
        logits = o_ref[...] * inv_scale
        col = jax.lax.broadcasted_iota(jnp.int32, logits.shape, 1)
        valid = col < num_classes
        masked = jnp.where(valid, logits, -1e30)
        m = jnp.max(masked, axis=1, keepdims=True)
        s = masked - m
        e = jnp.where(valid, jnp.exp(s), 0.0)
        lse = jnp.log(jnp.sum(e, axis=1, keepdims=True))
        o_ref[...] = (s - lse).astype(o_ref.dtype)


# ------------------------------ graph preprocessing --------------------------


def build_normalized_adjacency(edge_index, num_nodes):
    """Add self loops + symmetric GCN normalization, scattered into a dense
    [N, N] f32 matrix so out = A_hat @ x matches propagate(aggr='add') with
    message = norm * x_j (aggregated at col), using degree(row) like the module."""
    self_loops = jnp.arange(num_nodes, dtype=edge_index.dtype)
    row = jnp.concatenate([edge_index[0], self_loops])
    col = jnp.concatenate([edge_index[1], self_loops])

    ones = jnp.ones_like(row, dtype=jnp.float32)
    deg = jnp.zeros((num_nodes,), jnp.float32).at[row].add(ones)  # >= 1 (self loops)
    deg_inv_sqrt = jnp.where(deg > 0, jax.lax.rsqrt(jnp.maximum(deg, 1e-12)), 0.0)
    norm = deg_inv_sqrt[row] * deg_inv_sqrt[col]

    return jnp.zeros((num_nodes, num_nodes), jnp.float32).at[col, row].add(norm)


def preprocess_graph(edge_index, num_nodes, *, tile_m=1024, tile_k=512):
    """One-time per-graph work (hoisted out of the forward pass):
    build A_hat, quantize to int8, pad, and compute the per-row-tile schedule of
    nonzero k-blocks for the block-skipping SpMM."""
    n = num_nodes

    # Reduction tile (<= 512, lane aligned); row tile a multiple of it.
    t_k = min(_round_up(tile_k, LANE), _round_up(n, LANE))
    t_m = min(_round_up(tile_m, t_k), _round_up(n, t_k))
    if _round_up(n, t_k) >= 2 * t_k:
        # v7x megacore: keep >= 2 row tiles so both TensorCores get work.
        t_m = min(t_m, _round_up(-(-n // 2), t_k))

    n_rows = _round_up(n, t_m)
    n_cols = _round_up(n, t_k)
    nm = n_rows // t_m
    nk = n_cols // t_k

    a = build_normalized_adjacency(edge_index, n)                  # f32 (n, n)
    a_p = _pad2(a, n_rows, n_cols)
    # int8 quantization (entries in [0, 1]); dequant scale applied in-kernel.
    a_q = jnp.clip(jnp.round(a_p * A_SCALE), 0, 127).astype(jnp.int8)

    # Per row-tile schedule of nonzero k-blocks (scalar-prefetch block skipping).
    blk_nz = (a_p != 0).reshape(nm, t_m, nk, t_k).any(axis=(1, 3))  # (nm, nk) bool
    counts = blk_nz.sum(axis=1).astype(jnp.int32)                   # (nm,)
    order = jnp.argsort(~blk_nz, axis=1, stable=True).astype(jnp.int32)
    last = jnp.take_along_axis(order, jnp.maximum(counts - 1, 0)[:, None], axis=1)
    kk = jnp.arange(nk, dtype=jnp.int32)[None, :]
    block_ids = jnp.where(kk < counts[:, None], order, last)        # repeat last idx
    nk_grid = max(int(counts.max()), 1)                             # static grid extent
    block_ids = block_ids[:, :nk_grid]

    return {
        "n": n, "t_m": t_m, "t_k": t_k, "n_rows": n_rows, "n_cols": n_cols,
        "nm": nm, "nk_grid": nk_grid,
        "a_q": a_q, "block_ids": block_ids, "counts": counts,
    }


# ------------------------------ forward ---------------------------------------


def gcn_net_forward(x, params, graph):
    n = graph["n"]
    t_m, t_k = graph["t_m"], graph["t_k"]
    n_rows, n_cols = graph["n_rows"], graph["n_cols"]
    nm, nk_grid = graph["nm"], graph["nk_grid"]
    a_q, block_ids, counts = graph["a_q"], graph["block_ids"], graph["counts"]

    f_in = x.shape[1]
    hidden = params["w1"].shape[1]
    num_classes = params["w2"].shape[1]
    hp = _round_up(hidden, LANE)       # lane-padded hidden dim
    cp = _round_up(num_classes, LANE)  # lane-padded class dim
    inv_scale = 1.0 / A_SCALE

    # bf16 MXU operands (f32 accumulation), lane-padded; padding sliced off at end.
    x_p = _pad2(x.astype(jnp.bfloat16), n_cols, f_in)
    w1_p = _pad2(params["w1"].astype(jnp.bfloat16), f_in, hp)
    b1_p = _pad2(params["b1"].astype(jnp.float32), 1, hp)
    w2_p = _pad2(params["w2"].astype(jnp.bfloat16), hp, cp)
    b2_p = _pad2(params["b2"].astype(jnp.float32), 1, cp)

    cparams = pltpu.CompilerParams(
        dimension_semantics=("parallel", "arbitrary"),
        vmem_limit_bytes=_VMEM_LIMIT)

    fuse_lin1 = f_in <= hp  # fold lin1 into prop1 when features are narrow

    if fuse_lin1:
        # ---- conv1 (linear + propagate) + relu + conv2 linear, fully fused ----
        z = pl.pallas_call(
            functools.partial(prop1_fused_kernel, inv_scale=inv_scale),
            out_shape=jax.ShapeDtypeStruct((n_rows, cp), jnp.bfloat16),
            grid_spec=pltpu.PrefetchScalarGridSpec(
                num_scalar_prefetch=2,
                grid=(nm, nk_grid),
                in_specs=[
                    pl.BlockSpec((t_m, t_k), lambda i, k, bid, cnt: (i, bid[i, k])),
                    pl.BlockSpec((t_k, f_in), lambda i, k, bid, cnt: (bid[i, k], 0)),
                    pl.BlockSpec((f_in, hp), lambda i, k, bid, cnt: (0, 0)),
                    pl.BlockSpec((1, hp), lambda i, k, bid, cnt: (0, 0)),
                    pl.BlockSpec((hp, cp), lambda i, k, bid, cnt: (0, 0)),
                    pl.BlockSpec((1, cp), lambda i, k, bid, cnt: (0, 0)),
                ],
                out_specs=pl.BlockSpec((t_m, cp), lambda i, k, bid, cnt: (i, 0)),
                scratch_shapes=[pltpu.VMEM((t_m, hp), jnp.float32)]),
            compiler_params=cparams,
        )(block_ids, counts, a_q, x_p, w1_p, b1_p, w2_p, b2_p)
    else:
        # ---- wide-feature path: separate lin1, then propagate + relu + lin2 ----
        nkc = n_cols // t_k
        h1 = pl.pallas_call(
            lin1_kernel,
            out_shape=jax.ShapeDtypeStruct((n_cols, hp), jnp.bfloat16),
            grid_spec=pltpu.PrefetchScalarGridSpec(
                num_scalar_prefetch=0,
                grid=(nkc,),
                in_specs=[pl.BlockSpec((t_k, f_in), lambda i: (i, 0)),
                          pl.BlockSpec((f_in, hp), lambda i: (0, 0)),
                          pl.BlockSpec((1, hp), lambda i: (0, 0))],
                out_specs=pl.BlockSpec((t_k, hp), lambda i: (i, 0))),
            compiler_params=pltpu.CompilerParams(
                dimension_semantics=("parallel",), vmem_limit_bytes=_VMEM_LIMIT),
        )(x_p, w1_p, b1_p)

        z = pl.pallas_call(
            functools.partial(prop1_lin2_kernel, inv_scale=inv_scale),
            out_shape=jax.ShapeDtypeStruct((n_rows, cp), jnp.bfloat16),
            grid_spec=pltpu.PrefetchScalarGridSpec(
                num_scalar_prefetch=2,
                grid=(nm, nk_grid),
                in_specs=[
                    pl.BlockSpec((t_m, t_k), lambda i, k, bid, cnt: (i, bid[i, k])),
                    pl.BlockSpec((t_k, hp), lambda i, k, bid, cnt: (bid[i, k], 0)),
                    pl.BlockSpec((hp, cp), lambda i, k, bid, cnt: (0, 0)),
                    pl.BlockSpec((1, cp), lambda i, k, bid, cnt: (0, 0)),
                ],
                out_specs=pl.BlockSpec((t_m, cp), lambda i, k, bid, cnt: (i, 0)),
                scratch_shapes=[pltpu.VMEM((t_m, hp), jnp.float32)]),
            compiler_params=cparams,
        )(block_ids, counts, a_q, h1, w2_p, b2_p)

    # ---- conv2 propagate + log_softmax (accumulates straight into f32 output) ----
    out_pad = pl.pallas_call(
        functools.partial(prop2_logsoftmax_kernel,
                          num_classes=num_classes, inv_scale=inv_scale),
        out_shape=jax.ShapeDtypeStruct((n_rows, cp), jnp.float32),
        grid_spec=pltpu.PrefetchScalarGridSpec(
            num_scalar_prefetch=2,
            grid=(nm, nk_grid),
            in_specs=[
                pl.BlockSpec((t_m, t_k), lambda i, k, bid, cnt: (i, bid[i, k])),
                pl.BlockSpec((t_k, cp), lambda i, k, bid, cnt: (bid[i, k], 0)),
            ],
            out_specs=pl.BlockSpec((t_m, cp), lambda i, k, bid, cnt: (i, 0))),
        compiler_params=cparams,
    )(block_ids, counts, a_q, z)

    return out_pad[:n, :num_classes]


# ------------------------------ reference & test -------------------------------


def reference_forward(x, edge_index, params):
    """Plain-JAX f32 reference matching the PyTorch module (eval mode)."""
    a = build_normalized_adjacency(edge_index, x.shape[0])
    h = x @ params["w1"] + params["b1"]
    h = jnp.maximum(a @ h, 0.0)
    z = h @ params["w2"] + params["b2"]
    return jax.nn.log_softmax(a @ z, axis=1)


def init_params(key, num_node_features, hidden, num_classes):
    k1, k2, k3, k4 = jax.random.split(key, 4)
    # Stored transposed relative to torch Linear ([in, out]) so kernels compute x @ W + b.
    w1 = jax.random.normal(k1, (num_node_features, hidden), jnp.float32) * 0.1
    b1 = jax.random.normal(k2, (1, hidden), jnp.float32) * 0.1
    w2 = jax.random.normal(k3, (hidden, num_classes), jnp.float32) * 0.1
    b2 = jax.random.normal(k4, (1, num_classes), jnp.float32) * 0.1
    return {"w1": w1, "b1": b1, "w2": w2, "b2": b2}


if __name__ == "__main__":
    key = jax.random.PRNGKey(0)
    k_x, k_p = jax.random.split(key)

    N = 8                 # nodes
    F_IN = 4              # dataset.num_node_features
    HIDDEN = 16
    NUM_CLASSES = 3       # dataset.num_classes

    x = jax.random.normal(k_x, (N, F_IN), jnp.float32)

    # small deterministic bidirectional ring graph: (2, E) with E = 2*N
    src = jnp.arange(N, dtype=jnp.int32)
    dst = (src + 1) % N
    edge_index = jnp.stack(
        [jnp.concatenate([src, dst]), jnp.concatenate([dst, src])], axis=0
    )

    params = init_params(k_p, F_IN, HIDDEN, NUM_CLASSES)

    # Per-graph preprocessing is hoisted out of the forward and reusable.
    graph = preprocess_graph(edge_index, N)

    out = gcn_net_forward(x, params, graph)
    out = jax.block_until_ready(out)

    assert out.shape == (N, NUM_CLASSES)
    # rows of log_softmax must exp-sum to ~1
    assert jnp.allclose(jnp.sum(jnp.exp(out), axis=1), 1.0, atol=1e-4)
    # numerical check vs the f32 reference (loose tolerance: int8 A_hat + bf16 operands)
    ref = reference_forward(x, edge_index, params)
    assert jnp.allclose(out, ref, atol=7e-2), float(jnp.max(jnp.abs(out - ref)))
    print("KERNEL_OK")
</pallas_src>

<mosaic_0001>
module attributes {stable_mosaic.version = 11 : i64} {
  func.func @prop1_fused_kernel(%arg0: i32, %arg1: i32, %arg2: memref<1x1xi32, #tpu.memory_space<smem>>, %arg3: memref<1xi32, #tpu.memory_space<smem>>, %arg4: memref<128x128xi8, #tpu.memory_space<vmem>>, %arg5: memref<128x4xbf16, #tpu.memory_space<vmem>>, %arg6: memref<4x128xbf16, #tpu.memory_space<vmem>>, %arg7: memref<1x128xf32, #tpu.memory_space<vmem>>, %arg8: memref<128x128xbf16, #tpu.memory_space<vmem>>, %arg9: memref<1x128xf32, #tpu.memory_space<vmem>>, %arg10: memref<128x128xbf16, #tpu.memory_space<vmem>>, %arg11: memref<128x128xf32, #tpu.memory_space<vmem>>) attributes {dimension_semantics = [#tpu.dimension_semantics<parallel>, #tpu.dimension_semantics<arbitrary>], iteration_bounds = array<i64: 1, 1>, scalar_prefetch = 2 : i64, scratch_operands = 1 : i64, tpu.core_type = #tpu.core_type<tc>, window_params = [{transform_indices = @transform_0, window_bounds = array<i64: 128, 128>}, {transform_indices = @transform_1, window_bounds = array<i64: 128, 4>}, {pipeline_mode = #tpu.pipeline_mode<synchronous>, transform_indices = @transform_2, window_bounds = array<i64: 4, 128>}, {pipeline_mode = #tpu.pipeline_mode<synchronous>, transform_indices = @transform_3, window_bounds = array<i64: 1, 128>}, {pipeline_mode = #tpu.pipeline_mode<synchronous>, transform_indices = @transform_4, window_bounds = array<i64: 128, 128>}, {pipeline_mode = #tpu.pipeline_mode<synchronous>, transform_indices = @transform_5, window_bounds = array<i64: 1, 128>}, {transform_indices = @transform_6, window_bounds = array<i64: 128, 128>}]} {
    %c0_i32 = arith.constant 0 : i32
    %0 = arith.cmpi eq, %arg1, %c0_i32 : i32
    %1 = arith.extui %0 : i1 to i32
    %c0_i32_0 = arith.constant 0 : i32
    %2 = arith.cmpi ne, %1, %c0_i32_0 : i32
    scf.if %2 {
      %cst = arith.constant 0.000000e+00 : f32
      %11 = vector.broadcast %cst : f32 to vector<128x128xf32>
      %c0 = arith.constant 0 : index
      %c0_4 = arith.constant 0 : index
      %12 = vector.load %arg11[%c0, %c0_4] : memref<128x128xf32, #tpu.memory_space<vmem>>, vector<128x128xf32>
      tpu.vector_store %arg11[%c0, %c0_4], %11 {strides = array<i32>} : memref<128x128xf32, #tpu.memory_space<vmem>>, vector<128x128xf32>,
    } else {
    }
    %3 = arith.index_cast %arg0 : i32 to index
    %4 = memref.load %arg3[%3] : memref<1xi32, #tpu.memory_space<smem>>
    %5 = arith.cmpi slt, %arg1, %4 : i32
    %6 = arith.extui %5 : i1 to i32
    %c0_i32_1 = arith.constant 0 : i32
    %7 = arith.cmpi ne, %6, %c0_i32_1 : i32
    scf.if %7 {
      %c0 = arith.constant 0 : index
      %c0_4 = arith.constant 0 : index
      %11 = vector.load %arg5[%c0, %c0_4] : memref<128x4xbf16, #tpu.memory_space<vmem>>, vector<128x4xbf16>
      %c0_5 = arith.constant 0 : index
      %c0_6 = arith.constant 0 : index
      %12 = vector.load %arg6[%c0_5, %c0_6] : memref<4x128xbf16, #tpu.memory_space<vmem>>, vector<4x128xbf16>
      %cst = arith.constant dense<0.000000e+00> : vector<128x128xf32>
      %13 = tpu.matmul %11, %12, %cst {dimension_numbers = #tpu.dot_dimension_numbers<[1], [0], [0], [1], [0, 0, 1, 1], [], []>} : vector<128x4xbf16>, vector<4x128xbf16>, vector<128x128xf32> -> vector<128x128xf32>
      %c0_7 = arith.constant 0 : index
      %c0_8 = arith.constant 0 : index
      %14 = vector.load %arg7[%c0_7, %c0_8] : memref<1x128xf32, #tpu.memory_space<vmem>>, vector<1x128xf32>
      %15 = vector.broadcast %14 : vector<1x128xf32> to vector<128x128xf32>
      %16 = arith.addf %13, %15 : vector<128x128xf32>
      %c0_9 = arith.constant 0 : index
      %c0_10 = arith.constant 0 : index
      %17 = vector.load %arg4[%c0_9, %c0_10] : memref<128x128xi8, #tpu.memory_space<vmem>>, vector<128x128xi8>
      %18 = arith.sitofp %17 : vector<128x128xi8> to vector<128x128xbf16>
      %c0_11 = arith.constant 0 : index
      %c0_12 = arith.constant 0 : index
      %19 = vector.load %arg11[%c0_11, %c0_12] : memref<128x128xf32, #tpu.memory_space<vmem>>, vector<128x128xf32>
      %20 = arith.truncf %16 : vector<128x128xf32> to vector<128x128xbf16>
      %cst_13 = arith.constant dense<0.000000e+00> : vector<128x128xf32>
      %21 = tpu.matmul %18, %20, %cst_13 {dimension_numbers = #tpu.dot_dimension_numbers<[1], [0], [0], [1], [0, 0, 1, 1], [], []>} : vector<128x128xbf16>, vector<128x128xbf16>, vector<128x128xf32> -> vector<128x128xf32>
      %22 = arith.addf %19, %21 : vector<128x128xf32>
      %c0_14 = arith.constant 0 : index
      %c0_15 = arith.constant 0 : index
      %23 = vector.load %arg11[%c0_14, %c0_15] : memref<128x128xf32, #tpu.memory_space<vmem>>, vector<128x128xf32>
      tpu.vector_store %arg11[%c0_14, %c0_15], %22 {strides = array<i32>} : memref<128x128xf32, #tpu.memory_space<vmem>>, vector<128x128xf32>,
    } else {
    }
    %c0_i32_2 = arith.constant 0 : i32
    %8 = arith.cmpi eq, %arg1, %c0_i32_2 : i32
    %9 = arith.extui %8 : i1 to i32
    %c0_i32_3 = arith.constant 0 : i32
    %10 = arith.cmpi ne, %9, %c0_i32_3 : i32
    scf.if %10 {
      %c0 = arith.constant 0 : index
      %c0_4 = arith.constant 0 : index
      %11 = vector.load %arg11[%c0, %c0_4] : memref<128x128xf32, #tpu.memory_space<vmem>>, vector<128x128xf32>
      %cst = arith.constant 0.00787401571 : f32
      %12 = vector.broadcast %cst : f32 to vector<128x128xf32>
      %13 = arith.mulf %11, %12 : vector<128x128xf32>
      %cst_5 = arith.constant 0.000000e+00 : f32
      %14 = vector.broadcast %cst_5 : f32 to vector<128x128xf32>
      %15 = arith.maximumf %13, %14 : vector<128x128xf32>
      %16 = arith.truncf %15 : vector<128x128xf32> to vector<128x128xbf16>
      %c0_6 = arith.constant 0 : index
      %c0_7 = arith.constant 0 : index
      %17 = vector.load %arg8[%c0_6, %c0_7] : memref<128x128xbf16, #tpu.memory_space<vmem>>, vector<128x128xbf16>
      %cst_8 = arith.constant dense<0.000000e+00> : vector<128x128xf32>
      %18 = tpu.matmul %16, %17, %cst_8 {dimension_numbers = #tpu.dot_dimension_numbers<[1], [0], [0], [1], [0, 0, 1, 1], [], []>} : vector<128x128xbf16>, vector<128x128xbf16>, vector<128x128xf32> -> vector<128x128xf32>
      %c0_9 = arith.constant 0 : index
      %c0_10 = arith.constant 0 : index
      %19 = vector.load %arg9[%c0_9, %c0_10] : memref<1x128xf32, #tpu.memory_space<vmem>>, vector<1x128xf32>
      %20 = vector.broadcast %19 : vector<1x128xf32> to vector<128x128xf32>
      %21 = arith.addf %18, %20 : vector<128x128xf32>
      %22 = arith.truncf %21 : vector<128x128xf32> to vector<128x128xbf16>
      %c0_11 = arith.constant 0 : index
      %c0_12 = arith.constant 0 : index
      %23 = vector.load %arg10[%c0_11, %c0_12] : memref<128x128xbf16, #tpu.memory_space<vmem>>, vector<128x128xbf16>
      tpu.vector_store %arg10[%c0_11, %c0_12], %22 {strides = array<i32>} : memref<128x128xbf16, #tpu.memory_space<vmem>>, vector<128x128xbf16>,
    } else {
    }
    return
  }
  func.func @transform_0(%arg0: i32, %arg1: i32, %arg2: memref<1x1xi32, #tpu.memory_space<smem>>, %arg3: memref<1xi32, #tpu.memory_space<smem>>) -> (i32, i32) {
    %0 = arith.index_cast %arg0 : i32 to index
    %1 = arith.index_cast %arg1 : i32 to index
    %2 = memref.load %arg2[%0, %1] : memref<1x1xi32, #tpu.memory_space<smem>>
    %c0_i32 = arith.constant 0 : i32
    return %arg0, %2 : i32, i32
  }
  func.func @transform_1(%arg0: i32, %arg1: i32, %arg2: memref<1x1xi32, #tpu.memory_space<smem>>, %arg3: memref<1xi32, #tpu.memory_space<smem>>) -> (i32, i32) {
    %0 = arith.index_cast %arg0 : i32 to index
    %1 = arith.index_cast %arg1 : i32 to index
    %2 = memref.load %arg2[%0, %1] : memref<1x1xi32, #tpu.memory_space<smem>>
    %c0_i32 = arith.constant 0 : i32
    %c0_i32_0 = arith.constant 0 : i32
    return %2, %c0_i32 : i32, i32
  }
  func.func @transform_2(%arg0: i32, %arg1: i32, %arg2: memref<1x1xi32, #tpu.memory_space<smem>>, %arg3: memref<1xi32, #tpu.memory_space<smem>>) -> (i32, i32) {
    %c0_i32 = arith.constant 0 : i32
    %c0_i32_0 = arith.constant 0 : i32
    %c0_i32_1 = arith.constant 0 : i32
    return %c0_i32, %c0_i32_0 : i32, i32
  }
  func.func @transform_3(%arg0: i32, %arg1: i32, %arg2: memref<1x1xi32, #tpu.memory_space<smem>>, %arg3: memref<1xi32, #tpu.memory_space<smem>>) -> (i32, i32) {
    %c0_i32 = arith.constant 0 : i32
    %c0_i32_0 = arith.constant 0 : i32
    %c0_i32_1 = arith.constant 0 : i32
    return %c0_i32, %c0_i32_0 : i32, i32
  }
  func.func @transform_4(%arg0: i32, %arg1: i32, %arg2: memref<1x1xi32, #tpu.memory_space<smem>>, %arg3: memref<1xi32, #tpu.memory_space<smem>>) -> (i32, i32) {
    %c0_i32 = arith.constant 0 : i32
    %c0_i32_0 = arith.constant 0 : i32
    %c0_i32_1 = arith.constant 0 : i32
    return %c0_i32, %c0_i32_0 : i32, i32
  }
  func.func @transform_5(%arg0: i32, %arg1: i32, %arg2: memref<1x1xi32, #tpu.memory_space<smem>>, %arg3: memref<1xi32, #tpu.memory_space<smem>>) -> (i32, i32) {
    %c0_i32 = arith.constant 0 : i32
    %c0_i32_0 = arith.constant 0 : i32
    %c0_i32_1 = arith.constant 0 : i32
    return %c0_i32, %c0_i32_0 : i32, i32
  }
  func.func @transform_6(%arg0: i32, %arg1: i32, %arg2: memref<1x1xi32, #tpu.memory_space<smem>>, %arg3: memref<1xi32, #tpu.memory_space<smem>>) -> (i32, i32) {
    %c0_i32 = arith.constant 0 : i32
    %c0_i32_0 = arith.constant 0 : i32
    return %arg0, %c0_i32 : i32, i32
  }
}

</mosaic_0001>

<llo_original>
// kernel: tpu_custom_call.1
$region0: #{tpu_custom_call.1}
  #allocation0 [shape = 'u32[]', space=smem, size = 0x4, offset = 0x4, fixed_abs, tag = 'smem constant byte address 0x4 - core index']
  #allocation1 [shape = 'u32[72,128]{1,0:T(1,128)}', space=vmem, size = 0x9000, scoped, tag = 'internal scratch']
  #allocation2 [shape = 'f32[128,128]{1,0:T(8,128)}', space=vmem, size = 0x10000, scoped, tag = 'scratch operand']
  #allocation3 [shape = 's32[1]{0}', space=sflag, size = 0x4, scoped, tag = 'scoped memory for tpu_custom_call.1']
  #allocation4 [shape = 's32[1,1]{1,0:T(1,128)S(6)}', space=smem, size = 0x200, scoped, tag = 'prefetched SMEM operand 0']
  #allocation5 [shape = 's32[1]{0:T(128)S(6)}', space=smem, size = 0x200, scoped, tag = 'prefetched SMEM operand 1']
  %s0 = inlined_call_operand.<no memory space> [shape: s32[1,1], index: 0, kind: input, shape index: {}]
  %s1 = inlined_call_operand.<no memory space> [shape: s32[1], index: 1, kind: input, shape index: {}]
  %s2 = inlined_call_operand.hbm [shape: s8[128,128], index: 2, kind: input, shape index: {}]
  %s3 = inlined_call_operand.vmem [shape: bf16[128,4], index: 3, kind: input, shape index: {}]
  %s4 = inlined_call_operand.vmem [shape: bf16[4,128], index: 4, kind: input, shape index: {}]
  %s5 = inlined_call_operand.vmem [shape: f32[1,128], index: 5, kind: input, shape index: {}]
  %s6 = inlined_call_operand.vmem [shape: bf16[128,128], index: 6, kind: input, shape index: {}]
  %s7 = inlined_call_operand.vmem [shape: f32[1,128], index: 7, kind: input, shape index: {}]
  %s8 = inlined_call_operand.hbm [shape: bf16[128,128], index: 8, kind: output, shape index: {}]
  %s9 = sld [smem:[#allocation0]]
  $region50: #{tpu_custom_call.1} parent=0
    _
  %s11 = ssub.s32 1, %s9
  %s12 = scalar_select 0, %s11, %s9
  %13 = sst [smem:[#allocation4]] %s0
  %14 = sst [smem:[#allocation5]] %s1
  $region1: #{tpu_custom_call.1} parent=0
    #allocation6 [shape = 'u8[16384]{0}', space=vmem, size = 0x4000, scoped, tag = 'input window, operand 2, single buffered']
    #allocation7 [shape = 's32[1]{0}', space=sflag, size = 0x4, scoped, tag = 'scoped memory for tpu_custom_call.1']
    #allocation8 [shape = 's32[1]{0}', space=sflag, size = 0x4, scoped, tag = 'scoped memory for tpu_custom_call.1']
    #allocation9 [shape = 'u8[32768]{0}', space=vmem, size = 0x8000, scoped, tag = 'output window, operand 0, single buffered']
    %15 = vsyncpa [#allocation7], 0
    %16 = vsyncpa [#allocation8], 0
    // Predicated region
    $region2: #{tpu_custom_call.1} parent=1 // pred_check
      _
    $region3: #{tpu_custom_call.1} parent=1 // pred_check_branch
      %18 = sbr.rel (0) target = $region5
    $region4: #{tpu_custom_call.1} parent=1 // pred_region
      %s19 = sadd.s32 0, 0
      %s20 = smul.u32 %s19, 128
      %s21 = sadd.s32 %s20, 0
      %s22 = sld [smem:[#allocation4 + %s21]]
      %24 = vsyncadd [#allocation7], 0
      %s25 = smul.addr %s22, 8
      %s26 = scalar_lea.hbm %s2, %s25
      %s27 = sshll.u32 %s26, 4
      %s28 = int_to_ptr.hbm [resolvable:$true] %s27
      %s29 = sshll.u32 [#allocation6], 4
      %s30 = int_to_ptr.vmem [resolvable:$true] %s29
      %35 = dma.hbm_to_vmem [thread:$0]  %s28, 512, %s30, [#allocation7], 128, 128, 8
    $region5: #{tpu_custom_call.1} parent=1 // pred_fallthru
      _
    // Predicated region
    $region6: #{tpu_custom_call.1} parent=1 // pred_check
      _
    $region7: #{tpu_custom_call.1} parent=1 // pred_check_branch
      %37 = sbr.rel (0) target = $region9
    $region8: #{tpu_custom_call.1} parent=1 // pred_region
      %s38 = sadd.s32 0, 0
      %s39 = smul.u32 %s38, 128
      %s40 = sadd.s32 %s39, 0
      %s41 = sld [smem:[#allocation4 + %s40]]
      %s42 = smul.u32 16, %s41
      %p43 = scmp.lt.s32.totalorder %s42, 15
      %s44 = scalar_select %p43, %s42, 15
      %s45 = smul.addr %s44, 4
      %s46 = scalar_lea.vmem %s3, %s45
      %s47 = sadd.s32 0, 0
      %s48 = smul.u32 %s47, 128
      %s49 = sadd.s32 %s48, 0
      %s50 = sld [smem:[#allocation4 + %s49]]
      %s51 = smul.u32 16, %s50
    $region9: #{tpu_custom_call.1} parent=1 // pred_fallthru
      _
    // Predicated region
    $region10: #{tpu_custom_call.1} parent=1 // pred_check
      _
    $region11: #{tpu_custom_call.1} parent=1 // pred_check_branch
      %53 = sbr.rel (0) target = $region13
    $region12: #{tpu_custom_call.1} parent=1 // pred_region
      _
    $region13: #{tpu_custom_call.1} parent=1 // pred_fallthru
      _
    // Predicated region
    $region14: #{tpu_custom_call.1} parent=1 // pred_check
      _
    $region15: #{tpu_custom_call.1} parent=1 // pred_check_branch
      %55 = sbr.rel (0) target = $region17
    $region16: #{tpu_custom_call.1} parent=1 // pred_region
      _
    $region17: #{tpu_custom_call.1} parent=1 // pred_fallthru
      _
    // Predicated region
    $region18: #{tpu_custom_call.1} parent=1 // pred_check
      _
    $region19: #{tpu_custom_call.1} parent=1 // pred_check_branch
      %57 = sbr.rel (0) target = $region21
    $region20: #{tpu_custom_call.1} parent=1 // pred_region
      _
    $region21: #{tpu_custom_call.1} parent=1 // pred_fallthru
      _
    // Predicated region
    $region22: #{tpu_custom_call.1} parent=1 // pred_check
      _
    $region23: #{tpu_custom_call.1} parent=1 // pred_check_branch
      %59 = sbr.rel (0) target = $region25
    $region24: #{tpu_custom_call.1} parent=1 // pred_region
      _
    $region25: #{tpu_custom_call.1} parent=1 // pred_fallthru
      _
    // Predicated region
    $region26: #{tpu_custom_call.1} parent=1 // pred_check
      _
    $region27: #{tpu_custom_call.1} parent=1 // pred_check_branch
      %61 = sbr.rel (0) target = $region29
    $region28: #{tpu_custom_call.1} parent=1 // pred_region
      %63 = dma.done [#allocation7], 512
    $region29: #{tpu_custom_call.1} parent=1 // pred_fallthru
      _
    %s64 = sadd.s32 0, 0
    %s65 = smul.u32 %s64, 128
    %s66 = sadd.s32 %s65, 0
    %s67 = sld [smem:[#allocation4 + %s66]]
    %s68 = smul.u32 16, %s67
    %p69 = scmp.lt.s32.totalorder %s68, 15
    %s70 = scalar_select %p69, %s68, 15
    %s71 = smul.addr %s70, 4
    %s72 = scalar_lea.vmem %s3, %s71
    %s73 = sadd.s32 0, 0
    %s74 = smul.u32 %s73, 128
    %s75 = sadd.s32 %s74, 0
    %s76 = sld [smem:[#allocation4 + %s75]]
    %s77 = sadd.s32 0, 0
    %s78 = smul.u32 %s77, 128
    %s79 = sadd.s32 %s78, 0
    %s80 = sld [smem:[#allocation4 + %s79]]
    %s81 = smul.u32 16, %s80
    %p82 = scmp.lt.s32.totalorder %s81, 15
    %s83 = scalar_select %p82, %s81, 15
    %s84 = smul.addr %s83, 4
    %s85 = scalar_lea.vmem %s3, %s84
    %s86 = sadd.s32 0, 0
    %s87 = smul.u32 %s86, 128
    %s88 = sadd.s32 %s87, 0
    %s89 = sld [smem:[#allocation4 + %s88]]
    %s90 = smul.u32 16, %s89
    %p92 = scmp.eq.s32.totalorder 0, 0
    // Predicated region
    $region30: #{tpu_custom_call.1} parent=1 // pred_check
      %p93 = pneg %p92
    $region31: #{tpu_custom_call.1} parent=1 // pred_check_branch
      %95 = sbr.rel (%p93) target = $region33
    $region32: #{tpu_custom_call.1} parent=1 // pred_region
      %96 = vst [vmem:[#allocation2] sm:$0xff] 0.0
      %97 = vst [vmem:[#allocation2 + $0x8] sm:$0xff] 0.0
      %98 = vst [vmem:[#allocation2 + $0x10] sm:$0xff] 0.0
      %99 = vst [vmem:[#allocation2 + $0x18] sm:$0xff] 0.0
      %100 = vst [vmem:[#allocation2 + $0x20] sm:$0xff] 0.0
      %101 = vst [vmem:[#allocation2 + $0x28] sm:$0xff] 0.0
      %102 = vst [vmem:[#allocation2 + $0x30] sm:$0xff] 0.0
      %103 = vst [vmem:[#allocation2 + $0x38] sm:$0xff] 0.0
      %104 = vst [vmem:[#allocation2 + $0x40] sm:$0xff] 0.0
      %105 = vst [vmem:[#allocation2 + $0x48] sm:$0xff] 0.0
      %106 = vst [vmem:[#allocation2 + $0x50] sm:$0xff] 0.0
      %107 = vst [vmem:[#allocation2 + $0x58] sm:$0xff] 0.0
      %108 = vst [vmem:[#allocation2 + $0x60] sm:$0xff] 0.0
      %109 = vst [vmem:[#allocation2 + $0x68] sm:$0xff] 0.0
      %110 = vst [vmem:[#allocation2 + $0x70] sm:$0xff] 0.0
      %111 = vst [vmem:[#allocation2 + $0x78] sm:$0xff] 0.0
    $region33: #{tpu_custom_call.1} parent=1 // pred_fallthru
      _
    %s112 = sld [smem:[#allocation5]]
    %p113 = scmp.lt.s32.totalorder 0, %s112
    // Predicated region
    $region34: #{tpu_custom_call.1} parent=1 // pred_check
      %p114 = pneg %p113
    $region35: #{tpu_custom_call.1} parent=1 // pred_check_branch
      %116 = sbr.rel (%p114) target = $region37
    $region36: #{tpu_custom_call.1} parent=1 // pred_region
      %v117 = vld [vmem:[%s85] sm:$0xf]
      %v118 = vld [vmem:[%s85 + $0x4] sm:$0xf]
      %v119 = vld [vmem:[%s85 + $0x8] sm:$0xf]
      %v120 = vld [vmem:[%s85 + $0xc] sm:$0xf]
      %v121 = vld [vmem:[%s85 + $0x10] sm:$0xf]
      %v122 = vld [vmem:[%s85 + $0x14] sm:$0xf]
      %v123 = vld [vmem:[%s85 + $0x18] sm:$0xf]
      %v124 = vld [vmem:[%s85 + $0x1c] sm:$0xf]
      %v125 = vld [vmem:[%s85 + $0x20] sm:$0xf]
      %v126 = vld [vmem:[%s85 + $0x24] sm:$0xf]
      %v127 = vld [vmem:[%s85 + $0x28] sm:$0xf]
      %v128 = vld [vmem:[%s85 + $0x2c] sm:$0xf]
      %v129 = vld [vmem:[%s85 + $0x30] sm:$0xf]
      %v130 = vld [vmem:[%s85 + $0x34] sm:$0xf]
      %v131 = vld [vmem:[%s85 + $0x38] sm:$0xf]
      %v132 = vld [vmem:[%s85 + $0x3c] sm:$0xf]
      %v133 = vld [vmem:[%s4] sm:$0x3]
      %v134 = vld [vmem:[%s5] sm:$0x1]
      %v136 = vperm.slane %v134, 0
      %v154 = vunpack.c.l.b16 %v117
      %v155 = vunpack.c.l.b16 %v118
      %v156 = vunpack.c.l.b16 %v119
      %v157 = vunpack.c.l.b16 %v120
      %v158 = vunpack.c.l.b16 %v121
      %v159 = vunpack.c.l.b16 %v122
      %v160 = vunpack.c.l.b16 %v123
      %v161 = vunpack.c.l.b16 %v124
      %v162 = vunpack.c.l.b16 %v125
      %v163 = vunpack.c.l.b16 %v126
      %v164 = vunpack.c.l.b16 %v127
      %v165 = vunpack.c.l.b16 %v128
      %v166 = vunpack.c.l.b16 %v129
      %v167 = vunpack.c.l.b16 %v130
      %v168 = vunpack.c.l.b16 %v131
      %v169 = vunpack.c.l.b16 %v132
      %v170 = vpack.c.b16 %v155, %v154
      %v171 = vpack.c.b16 %v157, %v156
      %v172 = vpack.c.b16 %v159, %v158
      %v173 = vpack.c.b16 %v161, %v160
      %v174 = vpack.c.b16 %v163, %v162
      %v175 = vpack.c.b16 %v165, %v164
      %v176 = vpack.c.b16 %v167, %v166
      %v177 = vpack.c.b16 %v169, %v168
      %vm178 = vcmask 31744
      %v180 = vsel %vm178, %v170, 0
      %v183 = vsel %vm178, %v171, 0
      %v186 = vsel %vm178, %v172, 0
      %v189 = vsel %vm178, %v173, 0
      %v192 = vsel %vm178, %v174, 0
      %v195 = vsel %vm178, %v175, 0
      %v198 = vsel %vm178, %v176, 0
      %v201 = vsel %vm178, %v177, 0
      %vm203 = vcmask 1041408
      %v205 = vsel %vm203, %v133, 0
      %207 = vmatpush.bf16.msra.mxu0 0
      %208 = vmatpush.bf16.msra.mxu0 0
      %209 = vmatpush.bf16.msra.mxu0 0
      %210 = vmatpush.bf16.msra.mxu0 0
      %211 = vmatpush.bf16.msra.mxu0 0
      %212 = vmatpush.bf16.msra.mxu0 0
      %213 = vmatpush.bf16.msra.mxu0 0
      %214 = vmatpush.bf16.msra.mxu0 %v205
      %215 = vmatmul.bf16.gmra.mxu0 %v180
      %v216 = vpop.f32.mrf.mxu0
      %v217 = vadd.f32 %v136, %v216
      %v218 = vpop.f32.mrf.mxu0
      %v219 = vadd.f32 %v136, %v218
      %220 = vmatmul.bf16.gmra.mxu0 %v183
      %v221 = vpop.f32.mrf.mxu0
      %v222 = vadd.f32 %v136, %v221
      %v223 = vpop.f32.mrf.mxu0
      %v224 = vadd.f32 %v136, %v223
      %225 = vmatmul.bf16.gmra.mxu0 %v186
      %v226 = vpop.f32.mrf.mxu0
      %v227 = vadd.f32 %v136, %v226
      %v228 = vpop.f32.mrf.mxu0
      %v229 = vadd.f32 %v136, %v228
      %230 = vmatmul.bf16.gmra.mxu0 %v189
      %v231 = vpop.f32.mrf.mxu0
      %v232 = vadd.f32 %v136, %v231
      %v233 = vpop.f32.mrf.mxu0
      %v234 = vadd.f32 %v136, %v233
      %235 = vmatmul.bf16.gmra.mxu0 %v192
      %v236 = vpop.f32.mrf.mxu0
      %v237 = vadd.f32 %v136, %v236
      %v238 = vpop.f32.mrf.mxu0
      %v239 = vadd.f32 %v136, %v238
      %240 = vmatmul.bf16.gmra.mxu0 %v195
      %v241 = vpop.f32.mrf.mxu0
      %v242 = vadd.f32 %v136, %v241
      %v243 = vpop.f32.mrf.mxu0
      %v244 = vadd.f32 %v136, %v243
      %245 = vmatmul.bf16.gmra.mxu0 %v198
      %v246 = vpop.f32.mrf.mxu0
      %v247 = vadd.f32 %v136, %v246
      %v248 = vpop.f32.mrf.mxu0
      %v249 = vadd.f32 %v136, %v248
      %250 = vmatmul.bf16.gmra.mxu0 %v201
      %v251 = vpop.f32.mrf.mxu0
      %v252 = vadd.f32 %v136, %v251
      %v253 = vpop.f32.mrf.mxu0
      %v254 = vadd.f32 %v136, %v253
      %255 = vdwg.mxu0
      %v256 = vld [vmem:[#allocation6] sm:$0xff]
      %v257 = vld [vmem:[#allocation6 + $0x8] sm:$0xff]
      %v258 = vld [vmem:[#allocation6 + $0x10] sm:$0xff]
      %v259 = vld [vmem:[#allocation6 + $0x18] sm:$0xff]
      %v260 = vunpack.c.0.s8 %v256
      %v261 = vunpack.c.1.s8 %v256
      %v262 = vunpack.c.2.s8 %v256
      %v263 = vunpack.c.3.s8 %v256
      %v264 = vunpack.c.0.s8 %v257
      %v265 = vunpack.c.1.s8 %v257
      %v266 = vunpack.c.2.s8 %v257
      %v267 = vunpack.c.3.s8 %v257
      %v268 = vunpack.c.0.s8 %v258
      %v269 = vunpack.c.1.s8 %v258
      %v270 = vunpack.c.2.s8 %v258
      %v271 = vunpack.c.3.s8 %v258
      %v272 = vunpack.c.0.s8 %v259
      %v273 = vunpack.c.1.s8 %v259
      %v274 = vunpack.c.2.s8 %v259
      %v275 = vunpack.c.3.s8 %v259
      %v276 = vcvt.s32.f32 %v260
      %v277 = vcvt.s32.f32 %v261
      %v278 = vcvt.s32.f32 %v262
      %v279 = vcvt.s32.f32 %v263
      %v280 = vcvt.s32.f32 %v264
      %v281 = vcvt.s32.f32 %v265
      %v282 = vcvt.s32.f32 %v266
      %v283 = vcvt.s32.f32 %v267
      %v284 = vcvt.s32.f32 %v268
      %v285 = vcvt.s32.f32 %v269
      %v286 = vcvt.s32.f32 %v270
      %v287 = vcvt.s32.f32 %v271
      %v288 = vcvt.s32.f32 %v272
      %v289 = vcvt.s32.f32 %v273
      %v290 = vcvt.s32.f32 %v274
      %v291 = vcvt.s32.f32 %v275
      %v292 = vpack.c.bf16 %v277, %v276
      %v293 = vpack.c.bf16 %v279, %v278
      %v294 = vpack.c.bf16 %v281, %v280
      %v295 = vpack.c.bf16 %v283, %v282
      %v296 = vpack.c.bf16 %v285, %v284
      %v297 = vpack.c.bf16 %v287, %v286
      %v298 = vpack.c.bf16 %v289, %v288
      %v299 = vpack.c.bf16 %v291, %v290
      %v300 = vld [vmem:[#allocation2] sm:$0xff]
      %v301 = vld [vmem:[#allocation2 + $0x8] sm:$0xff]
      %v302 = vld [vmem:[#allocation2 + $0x10] sm:$0xff]
      %v303 = vld [vmem:[#allocation2 + $0x18] sm:$0xff]
      %v304 = vld [vmem:[#allocation2 + $0x20] sm:$0xff]
      %v305 = vld [vmem:[#allocation2 + $0x28] sm:$0xff]
      %v306 = vld [vmem:[#allocation2 + $0x30] sm:$0xff]
      %v307 = vld [vmem:[#allocation2 + $0x38] sm:$0xff]
      %v308 = vld [vmem:[#allocation2 + $0x40] sm:$0xff]
      %v309 = vld [vmem:[#allocation2 + $0x48] sm:$0xff]
      %v310 = vld [vmem:[#allocation2 + $0x50] sm:$0xff]
      %v311 = vld [vmem:[#allocation2 + $0x58] sm:$0xff]
      %v312 = vld [vmem:[#allocation2 + $0x60] sm:$0xff]
      %v313 = vld [vmem:[#allocation2 + $0x68] sm:$0xff]
      %v314 = vld [vmem:[#allocation2 + $0x70] sm:$0xff]
      %v315 = vld [vmem:[#allocation2 + $0x78] sm:$0xff]
      %v316 = vpack.c.bf16 %v219, %v217
      %v317 = vpack.c.bf16 %v224, %v222
      %v318 = vpack.c.bf16 %v229, %v227
      %v319 = vpack.c.bf16 %v234, %v232
      %v320 = vpack.c.bf16 %v239, %v237
      %v321 = vpack.c.bf16 %v244, %v242
      %v322 = vpack.c.bf16 %v249, %v247
      %v323 = vpack.c.bf16 %v254, %v252
      %324 = vmatpush.bf16.msra.mxu0 %v323
      %325 = vmatpush.bf16.msra.mxu0 %v322
      %326 = vmatpush.bf16.msra.mxu0 %v321
      %327 = vmatpush.bf16.msra.mxu0 %v320
      %328 = vmatpush.bf16.msra.mxu0 %v319
      %329 = vmatpush.bf16.msra.mxu0 %v318
      %330 = vmatpush.bf16.msra.mxu0 %v317
      %331 = vmatpush.bf16.msra.mxu0 %v316
      %332 = vmatmul.bf16.gmra.mxu0 %v292
      %v333 = vpop.f32.mrf.mxu0
      %v334 = vadd.f32 0.0, %v333
      %v335 = vpop.f32.mrf.mxu0
      %v336 = vadd.f32 0.0, %v335
      %337 = vmatmul.bf16.gmra.mxu0 %v293
      %v338 = vpop.f32.mrf.mxu0
      %v339 = vadd.f32 0.0, %v338
      %v340 = vpop.f32.mrf.mxu0
      %v341 = vadd.f32 0.0, %v340
      %342 = vmatmul.bf16.gmra.mxu0 %v294
      %v343 = vpop.f32.mrf.mxu0
      %v344 = vadd.f32 0.0, %v343
      %v345 = vpop.f32.mrf.mxu0
      %v346 = vadd.f32 0.0, %v345
      %347 = vmatmul.bf16.gmra.mxu0 %v295
      %v348 = vpop.f32.mrf.mxu0
      %v349 = vadd.f32 0.0, %v348
      %v350 = vpop.f32.mrf.mxu0
      %v351 = vadd.f32 0.0, %v350
      %352 = vmatmul.bf16.gmra.mxu0 %v296
      %v353 = vpop.f32.mrf.mxu0
      %v354 = vadd.f32 0.0, %v353
      %v355 = vpop.f32.mrf.mxu0
      %v356 = vadd.f32 0.0, %v355
      %357 = vmatmul.bf16.gmra.mxu0 %v297
      %v358 = vpop.f32.mrf.mxu0
      %v359 = vadd.f32 0.0, %v358
      %v360 = vpop.f32.mrf.mxu0
      %v361 = vadd.f32 0.0, %v360
      %362 = vmatmul.bf16.gmra.mxu0 %v298
      %v363 = vpop.f32.mrf.mxu0
      %v364 = vadd.f32 0.0, %v363
      %v365 = vpop.f32.mrf.mxu0
      %v366 = vadd.f32 0.0, %v365
      %367 = vmatmul.bf16.gmra.mxu0 %v299
      %v368 = vpop.f32.mrf.mxu0
      %v369 = vadd.f32 0.0, %v368
      %v370 = vpop.f32.mrf.mxu0
      %v371 = vadd.f32 0.0, %v370
      %372 = vdwg.mxu0
      %v373 = vadd.f32 %v300, %v334
      %v374 = vadd.f32 %v301, %v336
      %v375 = vadd.f32 %v302, %v339
      %v376 = vadd.f32 %v303, %v341
      %v377 = vadd.f32 %v304, %v344
      %v378 = vadd.f32 %v305, %v346
      %v379 = vadd.f32 %v306, %v349
      %v380 = vadd.f32 %v307, %v351
      %v381 = vadd.f32 %v308, %v354
      %v382 = vadd.f32 %v309, %v356
      %v383 = vadd.f32 %v310, %v359
      %v384 = vadd.f32 %v311, %v361
      %v385 = vadd.f32 %v312, %v364
      %v386 = vadd.f32 %v313, %v366
      %v387 = vadd.f32 %v314, %v369
      %v388 = vadd.f32 %v315, %v371
      %389 = vst [vmem:[#allocation2] sm:$0xff] %v373
      %390 = vst [vmem:[#allocation2 + $0x8] sm:$0xff] %v374
      %391 = vst [vmem:[#allocation2 + $0x10] sm:$0xff] %v375
      %392 = vst [vmem:[#allocation2 + $0x18] sm:$0xff] %v376
      %393 = vst [vmem:[#allocation2 + $0x20] sm:$0xff] %v377
      %394 = vst [vmem:[#allocation2 + $0x28] sm:$0xff] %v378
      %395 = vst [vmem:[#allocation2 + $0x30] sm:$0xff] %v379
      %396 = vst [vmem:[#allocation2 + $0x38] sm:$0xff] %v380
      %397 = vst [vmem:[#allocation2 + $0x40] sm:$0xff] %v381
      %398 = vst [vmem:[#allocation2 + $0x48] sm:$0xff] %v382
      %399 = vst [vmem:[#allocation2 + $0x50] sm:$0xff] %v383
      %400 = vst [vmem:[#allocation2 + $0x58] sm:$0xff] %v384
      %401 = vst [vmem:[#allocation2 + $0x60] sm:$0xff] %v385
      %402 = vst [vmem:[#allocation2 + $0x68] sm:$0xff] %v386
      %403 = vst [vmem:[#allocation2 + $0x70] sm:$0xff] %v387
      %404 = vst [vmem:[#allocation2 + $0x78] sm:$0xff] %v388
    $region37: #{tpu_custom_call.1} parent=1 // pred_fallthru
      _
    // Predicated region
    $region38: #{tpu_custom_call.1} parent=1 // pred_check
      %p405 = pneg %p92
    $region39: #{tpu_custom_call.1} parent=1 // pred_check_branch
      %407 = sbr.rel (%p405) target = $region41
    $region40: #{tpu_custom_call.1} parent=1 // pred_region
      %v408 = vld [vmem:[#allocation2] sm:$0xff]
      %v409 = vld [vmem:[#allocation2 + $0x8] sm:$0xff]
      %v410 = vld [vmem:[#allocation2 + $0x10] sm:$0xff]
      %v411 = vld [vmem:[#allocation2 + $0x18] sm:$0xff]
      %v412 = vld [vmem:[#allocation2 + $0x20] sm:$0xff]
      %v413 = vld [vmem:[#allocation2 + $0x28] sm:$0xff]
      %v414 = vld [vmem:[#allocation2 + $0x30] sm:$0xff]
      %v415 = vld [vmem:[#allocation2 + $0x38] sm:$0xff]
      %v416 = vld [vmem:[#allocation2 + $0x40] sm:$0xff]
      %v417 = vld [vmem:[#allocation2 + $0x48] sm:$0xff]
      %v418 = vld [vmem:[#allocation2 + $0x50] sm:$0xff]
      %v419 = vld [vmem:[#allocation2 + $0x58] sm:$0xff]
      %v420 = vld [vmem:[#allocation2 + $0x60] sm:$0xff]
      %v421 = vld [vmem:[#allocation2 + $0x68] sm:$0xff]
      %v422 = vld [vmem:[#allocation2 + $0x70] sm:$0xff]
      %v423 = vld [vmem:[#allocation2 + $0x78] sm:$0xff]
      %v424 = vmul.f32 %v408, 0.007874016
      %v425 = vmul.f32 %v409, 0.007874016
      %v426 = vmul.f32 %v410, 0.007874016
      %v427 = vmul.f32 %v411, 0.007874016
      %v428 = vmul.f32 %v412, 0.007874016
      %v429 = vmul.f32 %v413, 0.007874016
      %v430 = vmul.f32 %v414, 0.007874016
      %v431 = vmul.f32 %v415, 0.007874016
      %v432 = vmul.f32 %v416, 0.007874016
      %v433 = vmul.f32 %v417, 0.007874016
      %v434 = vmul.f32 %v418, 0.007874016
      %v435 = vmul.f32 %v419, 0.007874016
      %v436 = vmul.f32 %v420, 0.007874016
      %v437 = vmul.f32 %v421, 0.007874016
      %v438 = vmul.f32 %v422, 0.007874016
      %v439 = vmul.f32 %v423, 0.007874016
      %v440 = vmax.f32 %v424, 0.0
      %v441 = vmax.f32 %v425, 0.0
      %v442 = vmax.f32 %v426, 0.0
      %v443 = vmax.f32 %v427, 0.0
      %v444 = vmax.f32 %v428, 0.0
      %v445 = vmax.f32 %v429, 0.0
      %v446 = vmax.f32 %v430, 0.0
      %v447 = vmax.f32 %v431, 0.0
      %v448 = vmax.f32 %v432, 0.0
      %v449 = vmax.f32 %v433, 0.0
      %v450 = vmax.f32 %v434, 0.0
      %v451 = vmax.f32 %v435, 0.0
      %v452 = vmax.f32 %v436, 0.0
      %v453 = vmax.f32 %v437, 0.0
      %v454 = vmax.f32 %v438, 0.0
      %v455 = vmax.f32 %v439, 0.0
      %v456 = vpack.c.bf16 %v441, %v440
      %v457 = vpack.c.bf16 %v443, %v442
      %v458 = vpack.c.bf16 %v445, %v444
      %v459 = vpack.c.bf16 %v447, %v446
      %v460 = vpack.c.bf16 %v449, %v448
      %v461 = vpack.c.bf16 %v451, %v450
      %v462 = vpack.c.bf16 %v453, %v452
      %v463 = vpack.c.bf16 %v455, %v454
      %v464 = vld [vmem:[%s6] sm:$0xf]
      %v465 = vld [vmem:[%s6 + $0x4] sm:$0xf]
      %v466 = vld [vmem:[%s6 + $0x8] sm:$0xf]
      %v467 = vld [vmem:[%s6 + $0xc] sm:$0xf]
      %v468 = vld [vmem:[%s6 + $0x10] sm:$0xf]
      %v469 = vld [vmem:[%s6 + $0x14] sm:$0xf]
      %v470 = vld [vmem:[%s6 + $0x18] sm:$0xf]
      %v471 = vld [vmem:[%s6 + $0x1c] sm:$0xf]
      %v472 = vld [vmem:[%s6 + $0x20] sm:$0xf]
      %v473 = vld [vmem:[%s6 + $0x24] sm:$0xf]
      %v474 = vld [vmem:[%s6 + $0x28] sm:$0xf]
      %v475 = vld [vmem:[%s6 + $0x2c] sm:$0xf]
      %v476 = vld [vmem:[%s6 + $0x30] sm:$0xf]
      %v477 = vld [vmem:[%s6 + $0x34] sm:$0xf]
      %v478 = vld [vmem:[%s6 + $0x38] sm:$0xf]
      %v479 = vld [vmem:[%s6 + $0x3c] sm:$0xf]
      %v480 = vld [vmem:[%s7] sm:$0x1]
      %v482 = vperm.slane %v480, 0
      %v500 = vunpack.c.l.b16 %v464
      %v501 = vunpack.c.l.b16 %v465
      %v502 = vunpack.c.l.b16 %v466
      %v503 = vunpack.c.l.b16 %v467
      %v504 = vunpack.c.l.b16 %v468
      %v505 = vunpack.c.l.b16 %v469
      %v506 = vunpack.c.l.b16 %v470
      %v507 = vunpack.c.l.b16 %v471
      %v508 = vunpack.c.l.b16 %v472
      %v509 = vunpack.c.l.b16 %v473
      %v510 = vunpack.c.l.b16 %v474
      %v511 = vunpack.c.l.b16 %v475
      %v512 = vunpack.c.l.b16 %v476
      %v513 = vunpack.c.l.b16 %v477
      %v514 = vunpack.c.l.b16 %v478
      %v515 = vunpack.c.l.b16 %v479
      %v516 = vpack.c.b16 %v501, %v500
      %v517 = vpack.c.b16 %v503, %v502
      %v518 = vpack.c.b16 %v505, %v504
      %v519 = vpack.c.b16 %v507, %v506
      %v520 = vpack.c.b16 %v509, %v508
      %v521 = vpack.c.b16 %v511, %v510
      %v522 = vpack.c.b16 %v513, %v512
      %v523 = vpack.c.b16 %v515, %v514
      %532 = vmatpush.bf16.msra.mxu0 %v523
      %533 = vmatpush.bf16.msra.mxu0 %v522
      %534 = vmatpush.bf16.msra.mxu0 %v521
      %535 = vmatpush.bf16.msra.mxu0 %v520
      %536 = vmatpush.bf16.msra.mxu0 %v519
      %537 = vmatpush.bf16.msra.mxu0 %v518
      %538 = vmatpush.bf16.msra.mxu0 %v517
      %539 = vmatpush.bf16.msra.mxu0 %v516
      %540 = vmatmul.bf16.gmra.mxu0 %v456
      %v541 = vpop.f32.mrf.mxu0
      %v542 = vadd.f32 %v482, %v541
      %v543 = vpop.f32.mrf.mxu0
      %v544 = vadd.f32 %v482, %v543
      %545 = vmatmul.bf16.gmra.mxu0 %v457
      %v546 = vpop.f32.mrf.mxu0
      %v547 = vadd.f32 %v482, %v546
      %v548 = vpop.f32.mrf.mxu0
      %v549 = vadd.f32 %v482, %v548
      %550 = vmatmul.bf16.gmra.mxu0 %v458
      %v551 = vpop.f32.mrf.mxu0
      %v552 = vadd.f32 %v482, %v551
      %v553 = vpop.f32.mrf.mxu0
      %v554 = vadd.f32 %v482, %v553
      %555 = vmatmul.bf16.gmra.mxu0 %v459
      %v556 = vpop.f32.mrf.mxu0
      %v557 = vadd.f32 %v482, %v556
      %v558 = vpop.f32.mrf.mxu0
      %v559 = vadd.f32 %v482, %v558
      %560 = vmatmul.bf16.gmra.mxu0 %v460
      %v561 = vpop.f32.mrf.mxu0
      %v562 = vadd.f32 %v482, %v561
      %v563 = vpop.f32.mrf.mxu0
      %v564 = vadd.f32 %v482, %v563
      %565 = vmatmul.bf16.gmra.mxu0 %v461
      %v566 = vpop.f32.mrf.mxu0
      %v567 = vadd.f32 %v482, %v566
      %v568 = vpop.f32.mrf.mxu0
      %v569 = vadd.f32 %v482, %v568
      %570 = vmatmul.bf16.gmra.mxu0 %v462
      %v571 = vpop.f32.mrf.mxu0
      %v572 = vadd.f32 %v482, %v571
      %v573 = vpop.f32.mrf.mxu0
      %v574 = vadd.f32 %v482, %v573
      %575 = vmatmul.bf16.gmra.mxu0 %v463
      %v576 = vpop.f32.mrf.mxu0
      %v577 = vadd.f32 %v482, %v576
      %v578 = vpop.f32.mrf.mxu0
      %v579 = vadd.f32 %v482, %v578
      %580 = vdwg.mxu0
      %v581 = vpack.c.bf16 %v542, %v542
      %v582 = vpack.c.bf16 %v544, %v544
      %v583 = vpack.c.bf16 %v547, %v547
      %v584 = vpack.c.bf16 %v549, %v549
      %v585 = vpack.c.bf16 %v552, %v552
      %v586 = vpack.c.bf16 %v554, %v554
      %v587 = vpack.c.bf16 %v557, %v557
      %v588 = vpack.c.bf16 %v559, %v559
      %v589 = vpack.c.bf16 %v562, %v562
      %v590 = vpack.c.bf16 %v564, %v564
      %v591 = vpack.c.bf16 %v567, %v567
      %v592 = vpack.c.bf16 %v569, %v569
      %v593 = vpack.c.bf16 %v572, %v572
      %v594 = vpack.c.bf16 %v574, %v574
      %v595 = vpack.c.bf16 %v577, %v577
      %v596 = vpack.c.bf16 %v579, %v579
      %597 = vst [vmem:[#allocation9] sm:$0xf] %v581
      %598 = vst [vmem:[#allocation9 + $0x4] sm:$0xf] %v582
      %599 = vst [vmem:[#allocation9 + $0x8] sm:$0xf] %v583
      %600 = vst [vmem:[#allocation9 + $0xc] sm:$0xf] %v584
      %601 = vst [vmem:[#allocation9 + $0x10] sm:$0xf] %v585
      %602 = vst [vmem:[#allocation9 + $0x14] sm:$0xf] %v586
      %603 = vst [vmem:[#allocation9 + $0x18] sm:$0xf] %v587
      %604 = vst [vmem:[#allocation9 + $0x1c] sm:$0xf] %v588
      %605 = vst [vmem:[#allocation9 + $0x20] sm:$0xf] %v589
      %606 = vst [vmem:[#allocation9 + $0x24] sm:$0xf] %v590
      %607 = vst [vmem:[#allocation9 + $0x28] sm:$0xf] %v591
      %608 = vst [vmem:[#allocation9 + $0x2c] sm:$0xf] %v592
      %609 = vst [vmem:[#allocation9 + $0x30] sm:$0xf] %v593
      %610 = vst [vmem:[#allocation9 + $0x34] sm:$0xf] %v594
      %611 = vst [vmem:[#allocation9 + $0x38] sm:$0xf] %v595
      %612 = vst [vmem:[#allocation9 + $0x3c] sm:$0xf] %v596
    $region41: #{tpu_custom_call.1} parent=1 // pred_fallthru
      _
    // Predicated region
    $region42: #{tpu_custom_call.1} parent=1 // pred_check
      _
    $region43: #{tpu_custom_call.1} parent=1 // pred_check_branch
      %614 = sbr.rel (0) target = $region45
    $region44: #{tpu_custom_call.1} parent=1 // pred_region
      %616 = vsyncadd [#allocation8], 0
      %s617 = sshll.u32 [#allocation9], 4
      %s618 = int_to_ptr.vmem [resolvable:$true] %s617
      %s619 = sshll.u32 %s8, 4
      %s620 = int_to_ptr.hbm [resolvable:$true] %s619
      %625 = dma.vmem_to_hbm [thread:$0]  %s618, 1024, %s620, [#allocation8], 64, 64, 4
    $region45: #{tpu_custom_call.1} parent=1 // pred_fallthru
      _
    // Predicated region
    $region46: #{tpu_custom_call.1} parent=1 // pred_check
      _
    $region47: #{tpu_custom_call.1} parent=1 // pred_check_branch
      %627 = sbr.rel (0) target = $region49
    $region48: #{tpu_custom_call.1} parent=1 // pred_region
      %629 = dma.done [#allocation8], 1024
    $region49: #{tpu_custom_call.1} parent=1 // pred_fallthru
      _
    %630 = vsyncpa [#allocation7], 1
    %631 = vsyncpa [#allocation8], 1

</llo_original>
